<compile_context>
chip_gen: v7x
topology: tpu7x:2x2x1
jax: 0.10.0
libtpu: 0.0.40
codegen_flags: <defaults>
</compile_context>

<pallas_src>
import functools

import numpy as np
import jax
import jax.numpy as jnp
from jax import lax
from jax.experimental import pallas as pl
from jax.experimental.pallas import tpu as pltpu


def _ece_kernel(lowers_ref, uppers_ref, logits_ref, labels_ref, out_ref,
                conf_acc_ref, acc_acc_ref, *,
                n_total: int, tile_n: int, steps_per_part: int):
    p = pl.program_id(0)          # partition of N ("parallel")
    k = pl.program_id(1)          # reduction step within the partition

    @pl.when(k == 0)
    def _init():
        conf_acc_ref[...] = jnp.zeros_like(conf_acc_ref)
        acc_acc_ref[...] = jnp.zeros_like(acc_acc_ref)

    # (C, tile_n): classes on sublanes, rows on lanes -> lane-dense math.
    logits = logits_ref[...].astype(jnp.float32)
    labels = labels_ref[...]                                     # (1, tile_n) i32
    C = logits.shape[0]

    # Global row index of each lane; mask everything beyond the true N
    # (covers both the partial last tile and fully-padded steps).
    step = p * steps_per_part + k
    col = step * tile_n + lax.broadcasted_iota(jnp.int32, (1, tile_n), 1)
    valid = col < n_total                                        # (1, tile_n)

    # confidence = max softmax = 1 / sum(exp(logits - max)); single pass over
    # the logits block, no (N, C) softmax temporary.  Exact divide (feeds the
    # bin comparisons).
    m = jnp.max(logits, axis=0, keepdims=True)                   # (1, tile_n)
    denom = jnp.sum(jnp.exp(logits - m), axis=0, keepdims=True)  # (1, tile_n)
    conf = 1.0 / denom                                           # (1, tile_n)

    # prediction = first argmax of logits (softmax is monotone; same tie-break
    # as torch.max(softmaxes, 1)).
    row_ids = lax.broadcasted_iota(jnp.int32, (C, tile_n), 0)
    preds = jnp.min(jnp.where(logits >= m, row_ids, jnp.int32(C)),
                    axis=0, keepdims=True)                       # (1, tile_n)
    correct = (preds == labels).astype(jnp.float32)              # (1, tile_n)

    conf = jnp.where(valid, conf, jnp.float32(0.0))
    correct = jnp.where(valid, correct, jnp.float32(0.0))

    # Bin membership: (n_bins, 1) boundaries (resident input) vs (1, tile_n)
    # confidences -> (n_bins, tile_n) mask.  Masked rows have conf == 0, so
    # they fall in no bin (lowest bin is (0, 1/n_bins]).
    lo = lowers_ref[...]                                         # (n_bins, 1)
    hi = uppers_ref[...]                                         # (n_bins, 1)
    in_bin = jnp.logical_and(conf > lo, conf <= hi).astype(jnp.float32)

    # Lane-wide per-bin partial sums: pure VPU multiply-adds per tile; the
    # cross-lane reduction happens once per partition in _finalize.
    conf_acc_ref[...] += in_bin * conf
    acc_acc_ref[...] += in_bin * correct

    @pl.when(k == pl.num_programs(1) - 1)
    def _finalize():
        conf_sums = jnp.sum(conf_acc_ref[...], axis=1, keepdims=True)  # (n_bins, 1)
        acc_sums = jnp.sum(acc_acc_ref[...], axis=1, keepdims=True)    # (n_bins, 1)
        out_ref[...] = jnp.concatenate([conf_sums, acc_sums],
                                       axis=1)[None, ...]              # (1, n_bins, 2)


def ece_loss(logits, labels, n_bins: int = 15, tile_n: int | None = None,
             num_parts: int = 2):
    """logits: (N, C) float, labels: (N,) int.  Returns (1,) float32 ECE."""
    N, C = logits.shape
    itemsize = logits.dtype.itemsize

    # Same boundary values as torch.linspace / np.linspace in float32.
    boundaries = np.linspace(0.0, 1.0, n_bins + 1).astype(np.float32)
    lowers = jnp.asarray(boundaries[:-1]).reshape(n_bins, 1)
    uppers = jnp.asarray(boundaries[1:]).reshape(n_bins, 1)

    # Lane-dense layout: rows on the 128-lane axis (C is typically small).
    # Native dtype is kept (no f32 cast in HBM); upcast happens in-kernel.
    logits_t = jnp.transpose(logits)                   # (C, N)
    labels2d = labels.reshape(1, N).astype(jnp.int32)  # (1, N)

    if tile_n is None:
        # Target ~4 MiB per logits buffer (sublane-padded).  Together with the
        # labels buffers and the two (n_bins, tile_n) accumulators this stays
        # well under ~16 MiB per generation -> safe on v5e/v6e (128 MiB) and
        # v7x (64 MiB physical VMEM).
        c_pad = ((max(C, 1) + 7) // 8) * 8
        tile_n = (4 * 1024 * 1024) // (c_pad * itemsize)
        tile_n = max(128, min(32768, tile_n))
    n_pad = ((N + 127) // 128) * 128
    tile_n = min(int(tile_n), n_pad)
    tile_n = max(128, (tile_n // 128) * 128)

    steps_total = pl.cdiv(N, tile_n)
    num_parts = max(1, min(int(num_parts), steps_total))
    steps_per_part = pl.cdiv(steps_total, num_parts)
    last_block = steps_total - 1

    def data_map(p, k):
        # Clamp padded trailing steps onto the last real block; the kernel's
        # row-validity mask (computed from the *unclamped* step) zeroes their
        # contribution.
        return (0, jnp.minimum(p * steps_per_part + k, last_block))

    cost = pl.CostEstimate(
        flops=N * (4 * C + 8 * n_bins + 16),
        transcendentals=N * C,
        bytes_accessed=N * C * itemsize + N * 4 + num_parts * n_bins * 8,
    )

    partial_sums = pl.pallas_call(
        functools.partial(_ece_kernel, n_total=N, tile_n=tile_n,
                          steps_per_part=steps_per_part),
        out_shape=jax.ShapeDtypeStruct((num_parts, n_bins, 2), jnp.float32),
        grid=(num_parts, steps_per_part),
        in_specs=[
            pl.BlockSpec((n_bins, 1), lambda p, k: (0, 0)),   # lowers, resident
            pl.BlockSpec((n_bins, 1), lambda p, k: (0, 0)),   # uppers, resident
            pl.BlockSpec((C, tile_n), data_map),              # logits (C, N)
            pl.BlockSpec((1, tile_n), data_map),              # labels (1, N)
        ],
        out_specs=pl.BlockSpec((1, n_bins, 2), lambda p, k: (p, 0, 0)),
        scratch_shapes=[
            pltpu.VMEM((n_bins, tile_n), jnp.float32),  # per-bin conf partials
            pltpu.VMEM((n_bins, tile_n), jnp.float32),  # per-bin acc partials
        ],
        compiler_params=pltpu.CompilerParams(
            dimension_semantics=("parallel", "arbitrary"),
            vmem_limit_bytes=48 * 1024 * 1024),
        cost_estimate=cost,
    )(lowers, uppers, logits_t, labels2d)

    # Tiny finalization in plain JAX: combine per-partition bin sums, then
    # ece = sum_b |sum_conf_b - sum_acc_b| / N.
    totals = jnp.sum(partial_sums, axis=0)             # (n_bins, 2)
    ece = jnp.sum(jnp.abs(totals[:, 0] - totals[:, 1])) / jnp.float32(N)
    return ece.reshape(1)


def _ece_reference(logits, labels, n_bins: int = 15):
    """Pure-JAX mirror of the PyTorch forward (for correctness check)."""
    boundaries = np.linspace(0.0, 1.0, n_bins + 1).astype(np.float32)
    sm = jax.nn.softmax(logits.astype(jnp.float32), axis=1)
    conf = jnp.max(sm, axis=1)
    preds = jnp.argmax(sm, axis=1)
    acc = (preds == labels).astype(jnp.float32)
    n = logits.shape[0]
    ece = jnp.zeros((1,), jnp.float32)
    for b in range(n_bins):
        lo, hi = float(boundaries[b]), float(boundaries[b + 1])
        in_bin = (conf > lo) & (conf <= hi)
        prop = jnp.sum(in_bin.astype(jnp.float32)) / jnp.float32(n)
        cnt = jnp.sum(in_bin.astype(jnp.float32))
        s_conf = jnp.sum(jnp.where(in_bin, conf, 0.0))
        s_acc = jnp.sum(jnp.where(in_bin, acc, 0.0))
        contrib = jnp.where(
            cnt > 0,
            jnp.abs(s_conf / jnp.maximum(cnt, 1.0)
                    - s_acc / jnp.maximum(cnt, 1.0)) * prop,
            0.0)
        ece = ece + contrib
    return ece


if __name__ == "__main__":
    key = jax.random.PRNGKey(0)
    k1, k2 = jax.random.split(key)
    N, C = 200, 10
    logits = jax.random.normal(k1, (N, C), dtype=jnp.float32) * 2.0
    labels = jax.random.randint(k2, (N,), 0, C, dtype=jnp.int32)

    ref = jax.block_until_ready(_ece_reference(logits, labels, n_bins=15))

    # Multi-step / multi-partition path (grid (2, 1), last tile partial ->
    # exercises the row-validity masking and the per-partition outputs).
    ece_tiled = jax.block_until_ready(
        ece_loss(logits, labels, n_bins=15, tile_n=128, num_parts=2))
    # Default auto tile size (single lane-dense block covering all rows).
    ece_auto = jax.block_until_ready(ece_loss(logits, labels, n_bins=15))

    assert ece_tiled.shape == (1,)
    assert ece_auto.shape == (1,)
    assert jnp.allclose(ece_tiled, ref, atol=1e-5), (ece_tiled, ref)
    assert jnp.allclose(ece_auto, ref, atol=1e-5), (ece_auto, ref)
    print("KERNEL_OK")
</pallas_src>

<mosaic_0001>
module attributes {stable_mosaic.version = 11 : i64} {
  func.func @_ece_kernel(%arg0: i32, %arg1: i32, %arg2: memref<15x1xf32, #tpu.memory_space<vmem>>, %arg3: memref<15x1xf32, #tpu.memory_space<vmem>>, %arg4: memref<10x128xf32, #tpu.memory_space<vmem>>, %arg5: memref<1x128xi32, #tpu.memory_space<vmem>>, %arg6: memref<1x15x2xf32, #tpu.memory_space<vmem>>, %arg7: memref<15x128xf32, #tpu.memory_space<vmem>>, %arg8: memref<15x128xf32, #tpu.memory_space<vmem>>) attributes {dimension_semantics = [#tpu.dimension_semantics<parallel>, #tpu.dimension_semantics<arbitrary>], iteration_bounds = array<i64: 2, 1>, scalar_prefetch = 0 : i64, scratch_operands = 2 : i64, tpu.core_type = #tpu.core_type<tc>, window_params = [{pipeline_mode = #tpu.pipeline_mode<synchronous>, transform_indices = @transform_0, window_bounds = array<i64: 15, 1>}, {pipeline_mode = #tpu.pipeline_mode<synchronous>, transform_indices = @transform_1, window_bounds = array<i64: 15, 1>}, {transform_indices = @transform_2, window_bounds = array<i64: 10, 128>}, {transform_indices = @transform_3, window_bounds = array<i64: 1, 128>}, {transform_indices = @transform_4, window_bounds = array<i64: 1, 15, 2>}]} {
    %c0_i32 = arith.constant 0 : i32
    %0 = arith.cmpi eq, %arg1, %c0_i32 : i32
    %1 = arith.extui %0 : i1 to i32
    %c0_i32_0 = arith.constant 0 : i32
    %2 = arith.cmpi ne, %1, %c0_i32_0 : i32
    scf.if %2 {
      %cst_23 = arith.constant 0.000000e+00 : f32
      %60 = vector.broadcast %cst_23 : f32 to vector<15x128xf32>
      %c0_24 = arith.constant 0 : index
      %c0_25 = arith.constant 0 : index
      %61 = vector.load %arg7[%c0_24, %c0_25] : memref<15x128xf32, #tpu.memory_space<vmem>>, vector<15x128xf32>
      tpu.vector_store %arg7[%c0_24, %c0_25], %60 {strides = array<i32>} : memref<15x128xf32, #tpu.memory_space<vmem>>, vector<15x128xf32>,
      %cst_26 = arith.constant 0.000000e+00 : f32
      %62 = vector.broadcast %cst_26 : f32 to vector<15x128xf32>
      %c0_27 = arith.constant 0 : index
      %c0_28 = arith.constant 0 : index
      %63 = vector.load %arg8[%c0_27, %c0_28] : memref<15x128xf32, #tpu.memory_space<vmem>>, vector<15x128xf32>
      tpu.vector_store %arg8[%c0_27, %c0_28], %62 {strides = array<i32>} : memref<15x128xf32, #tpu.memory_space<vmem>>, vector<15x128xf32>,
    } else {
    }
    %c0 = arith.constant 0 : index
    %c0_1 = arith.constant 0 : index
    %3 = vector.load %arg4[%c0, %c0_1] : memref<10x128xf32, #tpu.memory_space<vmem>>, vector<10x128xf32>
    %c0_2 = arith.constant 0 : index
    %c0_3 = arith.constant 0 : index
    %4 = vector.load %arg5[%c0_2, %c0_3] : memref<1x128xi32, #tpu.memory_space<vmem>>, vector<1x128xi32>
    %c1_i32 = arith.constant 1 : i32
    %5 = arith.muli %arg0, %c1_i32 : i32
    %6 = arith.addi %5, %arg1 : i32
    %c128_i32 = arith.constant 128 : i32
    %7 = arith.muli %6, %c128_i32 : i32
    %8 = tpu.iota {dimensions = array<i32: 1>} : vector<1x128xi32>
    %9 = vector.broadcast %7 : i32 to vector<1x128xi32>
    %10 = arith.addi %9, %8 : vector<1x128xi32>
    %c200_i32 = arith.constant 200 : i32
    %11 = vector.broadcast %c200_i32 : i32 to vector<1x128xi32>
    %12 = arith.cmpi slt, %10, %11 : vector<1x128xi32>
    %cst = arith.constant dense<0xFF800000> : vector<128xf32>
    %13 = vector.multi_reduction <maximumf>, %3, %cst [0] : vector<10x128xf32> to vector<128xf32>
    %14 = vector.shape_cast %13 : vector<128xf32> to vector<1x128xf32>
    %15 = vector.broadcast %14 : vector<1x128xf32> to vector<10x128xf32>
    %16 = arith.subf %3, %15 : vector<10x128xf32>
    %17 = math.exp %16 : vector<10x128xf32>
    %cst_4 = arith.constant dense<0.000000e+00> : vector<128xf32>
    %18 = vector.multi_reduction <add>, %17, %cst_4 [0] : vector<10x128xf32> to vector<128xf32>
    %19 = vector.shape_cast %18 : vector<128xf32> to vector<1x128xf32>
    %cst_5 = arith.constant 1.000000e+00 : f32
    %20 = vector.broadcast %cst_5 : f32 to vector<1x128xf32>
    %21 = arith.divf %20, %19 : vector<1x128xf32>
    %22 = tpu.iota {dimensions = array<i32: 0>} : vector<10x128xi32>
    %23 = vector.broadcast %14 : vector<1x128xf32> to vector<10x128xf32>
    %24 = arith.cmpf oge, %3, %23 : vector<10x128xf32>
    %c10_i32 = arith.constant 10 : i32
    %25 = vector.broadcast %c10_i32 : i32 to vector<10x128xi32>
    %26 = arith.select %24, %22, %25 : vector<10x128xi1>, vector<10x128xi32>
    %cst_6 = arith.constant dense<2147483647> : vector<128xi32>
    %27 = vector.multi_reduction <minsi>, %26, %cst_6 [0] : vector<10x128xi32> to vector<128xi32>
    %28 = vector.shape_cast %27 : vector<128xi32> to vector<1x128xi32>
    %29 = arith.cmpi eq, %28, %4 : vector<1x128xi32>
    %30 = arith.extui %29 : vector<1x128xi1> to vector<1x128xi32>
    %31 = arith.sitofp %30 : vector<1x128xi32> to vector<1x128xf32>
    %cst_7 = arith.constant 0.000000e+00 : f32
    %32 = vector.broadcast %cst_7 : f32 to vector<1x128xf32>
    %33 = arith.select %12, %21, %32 : vector<1x128xi1>, vector<1x128xf32>
    %cst_8 = arith.constant 0.000000e+00 : f32
    %34 = vector.broadcast %cst_8 : f32 to vector<1x128xf32>
    %35 = arith.select %12, %31, %34 : vector<1x128xi1>, vector<1x128xf32>
    %c0_9 = arith.constant 0 : index
    %c0_10 = arith.constant 0 : index
    %36 = vector.load %arg2[%c0_9, %c0_10] : memref<15x1xf32, #tpu.memory_space<vmem>>, vector<15x1xf32>
    %c0_11 = arith.constant 0 : index
    %c0_12 = arith.constant 0 : index
    %37 = vector.load %arg3[%c0_11, %c0_12] : memref<15x1xf32, #tpu.memory_space<vmem>>, vector<15x1xf32>
    %38 = vector.broadcast %33 : vector<1x128xf32> to vector<15x128xf32>
    %39 = vector.broadcast %36 : vector<15x1xf32> to vector<15x128xf32>
    %40 = arith.cmpf ogt, %38, %39 : vector<15x128xf32>
    %41 = vector.broadcast %33 : vector<1x128xf32> to vector<15x128xf32>
    %42 = vector.broadcast %37 : vector<15x1xf32> to vector<15x128xf32>
    %43 = arith.cmpf ole, %41, %42 : vector<15x128xf32>
    %44 = arith.andi %40, %43 : vector<15x128xi1>
    %45 = arith.extui %44 : vector<15x128xi1> to vector<15x128xi32>
    %46 = arith.sitofp %45 : vector<15x128xi32> to vector<15x128xf32>
    %c0_13 = arith.constant 0 : index
    %c0_14 = arith.constant 0 : index
    %47 = vector.load %arg7[%c0_13, %c0_14] : memref<15x128xf32, #tpu.memory_space<vmem>>, vector<15x128xf32>
    %48 = vector.broadcast %33 : vector<1x128xf32> to vector<15x128xf32>
    %49 = arith.mulf %46, %48 : vector<15x128xf32>
    %50 = arith.addf %47, %49 : vector<15x128xf32>
    %c0_15 = arith.constant 0 : index
    %c0_16 = arith.constant 0 : index
    %51 = vector.load %arg7[%c0_15, %c0_16] : memref<15x128xf32, #tpu.memory_space<vmem>>, vector<15x128xf32>
    tpu.vector_store %arg7[%c0_15, %c0_16], %50 {strides = array<i32>} : memref<15x128xf32, #tpu.memory_space<vmem>>, vector<15x128xf32>,
    %c0_17 = arith.constant 0 : index
    %c0_18 = arith.constant 0 : index
    %52 = vector.load %arg8[%c0_17, %c0_18] : memref<15x128xf32, #tpu.memory_space<vmem>>, vector<15x128xf32>
    %53 = vector.broadcast %35 : vector<1x128xf32> to vector<15x128xf32>
    %54 = arith.mulf %46, %53 : vector<15x128xf32>
    %55 = arith.addf %52, %54 : vector<15x128xf32>
    %c0_19 = arith.constant 0 : index
    %c0_20 = arith.constant 0 : index
    %56 = vector.load %arg8[%c0_19, %c0_20] : memref<15x128xf32, #tpu.memory_space<vmem>>, vector<15x128xf32>
    tpu.vector_store %arg8[%c0_19, %c0_20], %55 {strides = array<i32>} : memref<15x128xf32, #tpu.memory_space<vmem>>, vector<15x128xf32>,
    %c0_i32_21 = arith.constant 0 : i32
    %57 = arith.cmpi eq, %arg1, %c0_i32_21 : i32
    %58 = arith.extui %57 : i1 to i32
    %c0_i32_22 = arith.constant 0 : i32
    %59 = arith.cmpi ne, %58, %c0_i32_22 : i32
    scf.if %59 {
      %c0_23 = arith.constant 0 : index
      %c0_24 = arith.constant 0 : index
      %60 = vector.load %arg7[%c0_23, %c0_24] : memref<15x128xf32, #tpu.memory_space<vmem>>, vector<15x128xf32>
      %cst_25 = arith.constant dense<0.000000e+00> : vector<15xf32>
      %61 = vector.multi_reduction <add>, %60, %cst_25 [1] : vector<15x128xf32> to vector<15xf32>
      %62 = vector.shape_cast %61 : vector<15xf32> to vector<15x1xf32>
      %c0_26 = arith.constant 0 : index
      %c0_27 = arith.constant 0 : index
      %63 = vector.load %arg8[%c0_26, %c0_27] : memref<15x128xf32, #tpu.memory_space<vmem>>, vector<15x128xf32>
      %cst_28 = arith.constant dense<0.000000e+00> : vector<15xf32>
      %64 = vector.multi_reduction <add>, %63, %cst_28 [1] : vector<15x128xf32> to vector<15xf32>
      %65 = vector.shape_cast %64 : vector<15xf32> to vector<15x1xf32>
      %66 = tpu.concatenate %62, %65 in 1 : vector<15x1xf32>, vector<15x1xf32> -> vector<15x2xf32>
      %67 = vector.shape_cast %66 : vector<15x2xf32> to vector<1x15x2xf32>
      %c0_29 = arith.constant 0 : index
      %c0_30 = arith.constant 0 : index
      %c0_31 = arith.constant 0 : index
      %68 = vector.load %arg6[%c0_29, %c0_30, %c0_31] : memref<1x15x2xf32, #tpu.memory_space<vmem>>, vector<1x15x2xf32>
      tpu.vector_store %arg6[%c0_29, %c0_30, %c0_31], %67 {strides = array<i32>} : memref<1x15x2xf32, #tpu.memory_space<vmem>>, vector<1x15x2xf32>,
    } else {
    }
    return
  }
  func.func @transform_0(%arg0: i32, %arg1: i32) -> (i32, i32) {
    %c0_i32 = arith.constant 0 : i32
    %c0_i32_0 = arith.constant 0 : i32
    %c0_i32_1 = arith.constant 0 : i32
    return %c0_i32, %c0_i32_0 : i32, i32
  }
  func.func @transform_1(%arg0: i32, %arg1: i32) -> (i32, i32) {
    %c0_i32 = arith.constant 0 : i32
    %c0_i32_0 = arith.constant 0 : i32
    %c0_i32_1 = arith.constant 0 : i32
    return %c0_i32, %c0_i32_0 : i32, i32
  }
  func.func @transform_2(%arg0: i32, %arg1: i32) -> (i32, i32) {
    %c1_i32 = arith.constant 1 : i32
    %0 = arith.muli %arg0, %c1_i32 : i32
    %1 = arith.addi %0, %arg1 : i32
    %c1_i32_0 = arith.constant 1 : i32
    %2 = arith.minsi %1, %c1_i32_0 : i32
    %c0_i32 = arith.constant 0 : i32
    %c0_i32_1 = arith.constant 0 : i32
    return %c0_i32, %2 : i32, i32
  }
  func.func @transform_3(%arg0: i32, %arg1: i32) -> (i32, i32) {
    %c1_i32 = arith.constant 1 : i32
    %0 = arith.muli %arg0, %c1_i32 : i32
    %1 = arith.addi %0, %arg1 : i32
    %c1_i32_0 = arith.constant 1 : i32
    %2 = arith.minsi %1, %c1_i32_0 : i32
    %c0_i32 = arith.constant 0 : i32
    %c0_i32_1 = arith.constant 0 : i32
    return %c0_i32, %2 : i32, i32
  }
  func.func @transform_4(%arg0: i32, %arg1: i32) -> (i32, i32, i32) {
    %c0_i32 = arith.constant 0 : i32
    %c0_i32_0 = arith.constant 0 : i32
    %c0_i32_1 = arith.constant 0 : i32
    return %arg0, %c0_i32, %c0_i32_0 : i32, i32, i32
  }
}

</mosaic_0001>

<llo_original>
// kernel: tpu_custom_call.1
$region0: #{tpu_custom_call.1}
  #allocation0 [shape = 'u32[]', space=smem, size = 0x4, offset = 0x4, fixed_abs, tag = 'smem constant byte address 0x4 - core index']
  #allocation1 [shape = 'u32[144,128]{1,0:T(1,128)}', space=vmem, size = 0x12000, scoped, tag = 'internal scratch']
  #allocation2 [shape = 'f32[15,128]{1,0:T(8,128)}', space=vmem, size = 0x2000, scoped, tag = 'scratch operand']
  #allocation3 [shape = 'f32[15,128]{1,0:T(8,128)}', space=vmem, size = 0x2000, scoped, tag = 'scratch operand']
  %s0 = inlined_call_operand.vmem [shape: f32[15,1], index: 0, kind: input, shape index: {}]
  %s1 = inlined_call_operand.vmem [shape: f32[15,1], index: 1, kind: input, shape index: {}]
  %s2 = inlined_call_operand.vmem [shape: f32[10,200], index: 2, kind: input, shape index: {}]
  %s3 = inlined_call_operand.vmem [shape: s32[1,200], index: 3, kind: input, shape index: {}]
  %s4 = inlined_call_operand.vmem [shape: f32[2,15,2], index: 4, kind: output, shape index: {}]
  %s5 = sld [smem:[#allocation0]]
  $region95: #{tpu_custom_call.1} parent=0
    _
  %s7 = ssub.s32 1, %s5
  %s8 = scalar_select 0, %s7, %s5
  $region1: #{tpu_custom_call.1} parent=0
    #allocation4 [shape = 'u8[16384]{0}', space=vmem, size = 0x4000, scoped, tag = 'input window, operand 2']
    loop: start=0, step=1, limit=4
    $region2: #{tpu_custom_call.1} parent=1 // loop_pre_header
      _
    $region3: #{tpu_custom_call.1} parent=1 // loop_header
      %s10 = sphi 0, %s14
      %p11 = scmp.ge.s32.totalorder %s10, 4
      %s17 = sphi 0, %s29
      %s18 = sphi 0, %s25
      %s19 = sphi 0, %s17
      %s20 = sphi 0, %s18
      %s21 = sphi 0, %s19
      %s22 = sphi 0, %s20
      %s30 = sphi 0, %s30
      %s32 = sphi 0, %s30
      %s33 = sphi 0, %s32
      %s47 = sphi 0, %s33
      %s51 = sphi 0, %s51
      %s53 = sphi 0, %s51
      %s54 = sphi 0, %s53
      %s68 = sphi 0, %s54
      %s80 = sphi 0, %s82
      %s83 = sphi 0, %s80
      %s84 = sphi 0, %s83
      %s100 = sphi 0, %s84
      %s112 = sphi 0, %s114
      %s115 = sphi 0, %s112
      %s116 = sphi 0, %s115
      %s132 = sphi 0, %s116
      %s138 = sphi 0, %s140
      %s141 = sphi 0, %s138
      %s142 = sphi 0, %s141
      %s158 = sphi 0, %s142
    $region4: #{tpu_custom_call.1} parent=1 // loop_header_branch
      %13 = sbr.rel (%p11) target = $region8
    $region5: #{tpu_custom_call.1} parent=1 // loop_body
      %s15 = ssub.s32 %s10, 1
      %s16 = ssub.s32 %s10, 2
      %s23 = sadd.s32 1, %s18
      %p24 = scmp.ge.s32.totalorder %s23, 1
      %s25 = scalar_select %p24, 0, %s23
      %s26 = sadd.s32 1, %s17
      %s27 = scalar_select %p24, %s26, %s17
      %p28 = scmp.ge.s32.totalorder %s27, 2
      %s29 = scalar_select %p28, 0, %s27
      %s31 = sadd.s32 %s30, 1
      %p34 = scmp.eq.s32.totalorder %s10, 1
      %p35 = scmp.ne.s32.totalorder %s30, %s32
      %p36 = scmp.eq.s32.totalorder %s10, 0
      %p37 = por %p35, %p36
      %p38 = scmp.ne.s32.totalorder %s30, %s32
      %p39 = scmp.eq.s32.totalorder %s15, 1
      %p40 = por %p38, %p39
      %p41 = scmp.ne.s32.totalorder %s32, %s33
      %p42 = scmp.eq.s32.totalorder %s15, 0
      %p43 = por %p41, %p42
      %p44 = scmp.ne.s32.totalorder %s32, %s33
      %p45 = scmp.eq.s32.totalorder %s16, 1
      %p46 = por %p44, %p45
      %p48 = scmp.ne.s32.totalorder %s33, %s47
      %p49 = scmp.eq.s32.totalorder %s16, 0
      %p50 = por %p48, %p49
      %s52 = sadd.s32 %s51, 1
      %p55 = scmp.eq.s32.totalorder %s10, 1
      %p56 = scmp.ne.s32.totalorder %s51, %s53
      %p57 = scmp.eq.s32.totalorder %s10, 0
      %p58 = por %p56, %p57
      %p59 = scmp.ne.s32.totalorder %s51, %s53
      %p60 = scmp.eq.s32.totalorder %s15, 1
      %p61 = por %p59, %p60
      %p62 = scmp.ne.s32.totalorder %s53, %s54
      %p63 = scmp.eq.s32.totalorder %s15, 0
      %p64 = por %p62, %p63
      %p65 = scmp.ne.s32.totalorder %s53, %s54
      %p66 = scmp.eq.s32.totalorder %s16, 1
      %p67 = por %p65, %p66
      %p69 = scmp.ne.s32.totalorder %s54, %s68
      %p70 = scmp.eq.s32.totalorder %s16, 0
      %p71 = por %p69, %p70
      %s72 = sadd.s32 %s17, %s18
      %p73 = scmp.lt.s32.totalorder %s72, 1
      %s74 = scalar_select %p73, %s72, 1
      %s75 = sadd.s32 %s29, %s25
      %p76 = scmp.lt.s32.totalorder %s75, 1
      %s77 = scalar_select %p76, %s75, 1
      %s78 = ssub.s32 %s74, %s77
      %p79 = scmp.eq.s32.totalorder %s78, 0
      %s81 = sadd.s32 %s80, 1
      %s82 = scalar_select %p79, %s80, %s81
      %p85 = pneg %p79
      %p86 = scmp.eq.s32.totalorder %s10, 1
      %p87 = por %p85, %p86
      %p88 = scmp.ne.s32.totalorder %s80, %s83
      %p89 = scmp.eq.s32.totalorder %s10, 0
      %p90 = por %p88, %p89
      %p91 = scmp.ne.s32.totalorder %s80, %s83
      %p92 = scmp.eq.s32.totalorder %s15, 1
      %p93 = por %p91, %p92
      %p94 = scmp.ne.s32.totalorder %s83, %s84
      %p95 = scmp.eq.s32.totalorder %s15, 0
      %p96 = por %p94, %p95
      %p97 = scmp.ne.s32.totalorder %s83, %s84
      %p98 = scmp.eq.s32.totalorder %s16, 1
      %p99 = por %p97, %p98
      %p101 = scmp.ne.s32.totalorder %s84, %s100
      %p102 = scmp.eq.s32.totalorder %s16, 0
      %p103 = por %p101, %p102
      %s104 = sadd.s32 %s17, %s18
      %p105 = scmp.lt.s32.totalorder %s104, 1
      %s106 = scalar_select %p105, %s104, 1
      %s107 = sadd.s32 %s29, %s25
      %p108 = scmp.lt.s32.totalorder %s107, 1
      %s109 = scalar_select %p108, %s107, 1
      %s110 = ssub.s32 %s106, %s109
      %p111 = scmp.eq.s32.totalorder %s110, 0
      %s113 = sadd.s32 %s112, 1
      %s114 = scalar_select %p111, %s112, %s113
      %p117 = pneg %p111
      %p118 = scmp.eq.s32.totalorder %s10, 1
      %p119 = por %p117, %p118
      %p120 = scmp.ne.s32.totalorder %s112, %s115
      %p121 = scmp.eq.s32.totalorder %s10, 0
      %p122 = por %p120, %p121
      %p123 = scmp.ne.s32.totalorder %s112, %s115
      %p124 = scmp.eq.s32.totalorder %s15, 1
      %p125 = por %p123, %p124
      %p126 = scmp.ne.s32.totalorder %s115, %s116
      %p127 = scmp.eq.s32.totalorder %s15, 0
      %p128 = por %p126, %p127
      %p129 = scmp.ne.s32.totalorder %s115, %s116
      %p130 = scmp.eq.s32.totalorder %s16, 1
      %p131 = por %p129, %p130
      %p133 = scmp.ne.s32.totalorder %s116, %s132
      %p134 = scmp.eq.s32.totalorder %s16, 0
      %p135 = por %p133, %p134
      %s136 = ssub.s32 %s17, %s29
      %p137 = scmp.eq.s32.totalorder %s136, 0
      %s139 = sadd.s32 %s138, 1
      %s140 = scalar_select %p137, %s138, %s139
      %p143 = pneg %p137
      %p144 = scmp.eq.s32.totalorder %s10, 1
      %p145 = por %p143, %p144
      %p146 = scmp.ne.s32.totalorder %s138, %s141
      %p147 = scmp.eq.s32.totalorder %s10, 0
      %p148 = por %p146, %p147
      %p149 = scmp.ne.s32.totalorder %s138, %s141
      %p150 = scmp.eq.s32.totalorder %s15, 1
      %p151 = por %p149, %p150
      %p152 = scmp.ne.s32.totalorder %s141, %s142
      %p153 = scmp.eq.s32.totalorder %s15, 0
      %p154 = por %p152, %p153
      %p155 = scmp.ne.s32.totalorder %s141, %s142
      %p156 = scmp.eq.s32.totalorder %s16, 1
      %p157 = por %p155, %p156
      %p159 = scmp.ne.s32.totalorder %s142, %s158
      %p160 = scmp.eq.s32.totalorder %s16, 0
      %p161 = por %p159, %p160
      %p162 = scmp.le.s32.totalorder 1, %s10
      %p163 = scmp.lt.s32.totalorder %s10, 3
      %p164 = pnand %p162, %p163
      %p165 = pneg %p164
      // Predicated region
      $region9: #{tpu_custom_call.1} parent=5 // pred_check
        _
      $region10: #{tpu_custom_call.1} parent=5 // pred_check_branch
        %167 = sbr.rel (%p164) target = $region12
      $region11: #{tpu_custom_call.1} parent=5 // pred_region
        %s168 = ssub.s32 %s10, 1
        // Predicated region
        $region13: #{tpu_custom_call.1} parent=11 // pred_check
          %p169 = pneg %p43
        $region14: #{tpu_custom_call.1} parent=11 // pred_check_branch
          %171 = sbr.rel (%p169) target = $region16
        $region15: #{tpu_custom_call.1} parent=11 // pred_region
          _
        $region16: #{tpu_custom_call.1} parent=11 // pred_fallthru
          _
        // Predicated region
        $region17: #{tpu_custom_call.1} parent=11 // pred_check
          %p172 = pneg %p64
        $region18: #{tpu_custom_call.1} parent=11 // pred_check_branch
          %174 = sbr.rel (%p172) target = $region20
        $region19: #{tpu_custom_call.1} parent=11 // pred_region
          _
        $region20: #{tpu_custom_call.1} parent=11 // pred_fallthru
          _
      $region12: #{tpu_custom_call.1} parent=5 // pred_fallthru
        _
      %p175 = scmp.lt.s32.totalorder %s10, 2
      // Predicated region
      $region21: #{tpu_custom_call.1} parent=5 // pred_check
        %p176 = pneg %p175
      $region22: #{tpu_custom_call.1} parent=5 // pred_check_branch
        %178 = sbr.rel (%p176) target = $region24
      $region23: #{tpu_custom_call.1} parent=5 // pred_region
        // Predicated region
        $region25: #{tpu_custom_call.1} parent=23 // pred_check
          %p179 = pneg %p90
        $region26: #{tpu_custom_call.1} parent=23 // pred_check_branch
          %181 = sbr.rel (%p179) target = $region28
        $region27: #{tpu_custom_call.1} parent=23 // pred_region
          %s182 = sand.u32 %s80, 1
          %s183 = sand.u32 %s80, 1
          %s184 = smul.addr %s183, 16
          %s185 = scalar_lea.vmem [#allocation4], %s184
          %s186 = sadd.s32 %s17, %s18
          %p187 = scmp.lt.s32.totalorder %s186, 1
          %s188 = scalar_select %p187, %s186, 1
          %s189 = smul.addr %s188, 8
          %s190 = scalar_lea.vmem %s2, %s189
          // Predicated region
          $region29: #{tpu_custom_call.1} parent=27 // pred_check
            _
          $region30: #{tpu_custom_call.1} parent=27 // pred_check_branch
            %192 = sbr.rel (0) target = $region32
          $region31: #{tpu_custom_call.1} parent=27 // pred_region
            // Predicated region
            $region33: #{tpu_custom_call.1} parent=31 // pred_check
              _
            $region34: #{tpu_custom_call.1} parent=31 // pred_check_branch
              %194 = sbr.rel (0) target = $region36
            $region35: #{tpu_custom_call.1} parent=31 // pred_region
              // Predicated region
              $region48: #{tpu_custom_call.1} parent=35 // pred_check
                _
              $region49: #{tpu_custom_call.1} parent=35 // pred_check_branch
                %211 = sbr.rel (0) target = $region51
              $region50: #{tpu_custom_call.1} parent=35 // pred_region
                loop: start=0, step=1, limit=1
                $region52: #{tpu_custom_call.1} parent=50 // loop_pre_header
                  _
                $region53: #{tpu_custom_call.1} parent=50 // loop_header
                  %s213 = sphi 0, %s217
                  %p214 = scmp.ge.s32.totalorder %s213, 1
                  %s218 = sphi %s190, %s190
                  %s219 = sphi %s185, %s185
                $region54: #{tpu_custom_call.1} parent=50 // loop_header_branch
                  %216 = sbr.rel (%p214) target = $region58
                $region55: #{tpu_custom_call.1} parent=50 // loop_body
                  %v220 = vld [vmem:[%s218] sm:$0xff]
                  %221 = vst [vmem:[%s219] sm:$0xff] %v220
                  %v222 = vld [vmem:[%s218 + $0x10] sm:$0xff]
                  %223 = vst [vmem:[%s219 + $0x8] sm:$0xff] %v222
                $region56: #{tpu_custom_call.1} parent=50 // loop_footer
                  %s217 = sadd.s32 1, %s213
                $region57: #{tpu_custom_call.1} parent=50 // loop_footer_branch
                  %212 = sbr.rel target = $region53
                $region58: #{tpu_custom_call.1} parent=50 // loop_exit
                  _
              $region51: #{tpu_custom_call.1} parent=35 // pred_fallthru
                _
              // Predicated region
              $region59: #{tpu_custom_call.1} parent=35 // pred_check
                _
              $region60: #{tpu_custom_call.1} parent=35 // pred_check_branch
                %225 = sbr.rel target = $region62
              $region61: #{tpu_custom_call.1} parent=35 // pred_region
                _
              $region62: #{tpu_custom_call.1} parent=35 // pred_fallthru
                _
            $region36: #{tpu_custom_call.1} parent=31 // pred_fallthru
              _
            // Predicated region
            $region37: #{tpu_custom_call.1} parent=31 // pred_check
              _
            $region38: #{tpu_custom_call.1} parent=31 // pred_check_branch
              %196 = sbr.rel target = $region40
            $region39: #{tpu_custom_call.1} parent=31 // pred_region
              loop: start=0, step=1, limit=1
              $region41: #{tpu_custom_call.1} parent=39 // loop_pre_header
                _
              $region42: #{tpu_custom_call.1} parent=39 // loop_header
                %s199 = sphi 0, %s203
                %p200 = scmp.ge.s32.totalorder %s199, 1
                %s204 = sphi %s190, %s190
                %s205 = sphi %s185, %s185
              $region43: #{tpu_custom_call.1} parent=39 // loop_header_branch
                %202 = sbr.rel (%p200) target = $region47
              $region44: #{tpu_custom_call.1} parent=39 // loop_body
                %v206 = vld [vmem:[%s204] sm:$0xff]
                %207 = vst [vmem:[%s205] sm:$0xff] %v206
                %v208 = vld [vmem:[%s204 + $0x10] sm:$0xff]
                %209 = vst [vmem:[%s205 + $0x8] sm:$0xff] %v208
              $region45: #{tpu_custom_call.1} parent=39 // loop_footer
                %s203 = sadd.s32 1, %s199
              $region46: #{tpu_custom_call.1} parent=39 // loop_footer_branch
                %198 = sbr.rel target = $region42
              $region47: #{tpu_custom_call.1} parent=39 // loop_exit
                _
            $region40: #{tpu_custom_call.1} parent=31 // pred_fallthru
              _
          $region32: #{tpu_custom_call.1} parent=27 // pred_fallthru
            _
          %226 = vnop
        $region28: #{tpu_custom_call.1} parent=23 // pred_fallthru
          _
        // Predicated region
        $region63: #{tpu_custom_call.1} parent=23 // pred_check
          %p227 = pneg %p122
        $region64: #{tpu_custom_call.1} parent=23 // pred_check_branch
          %229 = sbr.rel (%p227) target = $region66
        $region65: #{tpu_custom_call.1} parent=23 // pred_region
          %s230 = sadd.s32 %s17, %s18
          %p231 = scmp.lt.s32.totalorder %s230, 1
          %s232 = scalar_select %p231, %s230, 1
          %p233 = scmp.lt.s32.totalorder %s232, 1
          %s234 = scalar_select %p233, %s232, 1
          %s235 = scalar_lea.vmem %s3, %s234
          %s236 = sadd.s32 %s17, %s18
          %p237 = scmp.lt.s32.totalorder %s236, 1
          %s238 = scalar_select %p237, %s236, 1
        $region66: #{tpu_custom_call.1} parent=23 // pred_fallthru
          _
      $region24: #{tpu_custom_call.1} parent=5 // pred_fallthru
        _
      %p239 = scmp.le.s32.totalorder 1, %s10
      %p240 = scmp.lt.s32.totalorder %s10, 3
      %p241 = pnand %p239, %p240
      %p242 = pneg %p241
      // Predicated region
      $region67: #{tpu_custom_call.1} parent=5 // pred_check
        _
      $region68: #{tpu_custom_call.1} parent=5 // pred_check_branch
        %244 = sbr.rel (%p241) target = $region70
      $region69: #{tpu_custom_call.1} parent=5 // pred_region
        %s245 = ssub.s32 %s10, 1
        %s246 = sand.u32 %s83, 1
        %s247 = sand.u32 %s83, 1
        %s248 = smul.addr %s247, 16
        %s249 = scalar_lea.vmem [#allocation4], %s248
        // Predicated region
        $region71: #{tpu_custom_call.1} parent=69 // pred_check
          %p250 = pneg %p96
        $region72: #{tpu_custom_call.1} parent=69 // pred_check_branch
          %252 = sbr.rel (%p250) target = $region74
        $region73: #{tpu_custom_call.1} parent=69 // pred_region
          _
        $region74: #{tpu_custom_call.1} parent=69 // pred_fallthru
          _
        %p253 = pneg %p43
        %p254 = pneg %p40
        %p255 = pneg %p64
        %p256 = pneg %p61
        %s257 = sand.u32 %s83, 1
        %s258 = sand.u32 %s83, 1
        %s259 = smul.addr %s258, 16
        %s260 = scalar_lea.vmem [#allocation4], %s259
        %p261 = pneg %p96
        %p262 = pneg %p93
        %s263 = sadd.s32 %s19, %s20
        %p264 = scmp.lt.s32.totalorder %s263, 1
        %s265 = scalar_select %p264, %s263, 1
        %p266 = scmp.lt.s32.totalorder %s265, 1
        %s267 = scalar_select %p266, %s265, 1
        %s268 = scalar_lea.vmem %s3, %s267
        %p269 = pneg %p128
        %p270 = pneg %p125
        %p271 = pneg %p154
        %p272 = pneg %p151
        %p273 = scmp.lt.s32.totalorder %s19, 1
        %s274 = scalar_select %p273, %s19, 1
        %s275 = smul.addr %s274, 2
        %s276 = smul.addr %s275, 8
        %s277 = scalar_lea.vmem %s4, %s276
        %s278 = sadd.s32 %s19, %s20
        %p279 = scmp.lt.s32.totalorder %s278, 1
        %s280 = scalar_select %p279, %s278, 1
        %s281 = sadd.s32 %s19, %s20
        %p282 = scmp.lt.s32.totalorder %s281, 1
        %s283 = scalar_select %p282, %s281, 1
        %p284 = scmp.lt.s32.totalorder %s283, 1
        %s285 = scalar_select %p284, %s283, 1
        %s286 = scalar_lea.vmem %s3, %s285
        %s287 = sadd.s32 %s19, %s20
        %p288 = scmp.lt.s32.totalorder %s287, 1
        %s289 = scalar_select %p288, %s287, 1
        %p290 = scmp.lt.s32.totalorder %s19, 1
        %s291 = scalar_select %p290, %s19, 1
        %s292 = smul.addr %s291, 2
        %s293 = smul.addr %s292, 8
        %s294 = scalar_lea.vmem %s4, %s293
        %p295 = scmp.eq.s32.totalorder %s20, 0
        // Predicated region
        $region75: #{tpu_custom_call.1} parent=69 // pred_check
          %p296 = pneg %p295
        $region76: #{tpu_custom_call.1} parent=69 // pred_check_branch
          %298 = sbr.rel (%p296) target = $region78
        $region77: #{tpu_custom_call.1} parent=69 // pred_region
          %299 = vst [vmem:[#allocation2] sm:$0xff] 0.0
          %300 = vst [vmem:[#allocation2 + $0x8] sm:$0x7f] 0.0
          %301 = vst [vmem:[#allocation3] sm:$0xff] 0.0
          %302 = vst [vmem:[#allocation3 + $0x8] sm:$0x7f] 0.0
        $region78: #{tpu_custom_call.1} parent=69 // pred_fallthru
          _
        %v303 = vld [vmem:[%s249] sm:$0xff]
        %v304 = vld [vmem:[%s249 + $0x8] sm:$0x3]
        %v305 = vld [vmem:[%s286] sm:$0x1]
        %s306 = sadd.s32 %s19, %s20
        %s307 = smul.u32 %s306, 128
        %v308 = vlaneseq
        %v309 = vand.u32 %v308, 127
        %v310 = vstv %s307
        %v311 = vadd.s32 %v310, %v309
        %vm312 = vcmp.lt.s32.totalorder %v311, 200
        %vm313 = vcmask 1041408
        %v314 = vsel %vm313, %v304, -inf
        %v315 = vmax.f32 %v303, %v314
        %v316 = vrot.slane %v315, 4
        %v317 = vmax.f32 %v315, %v316
        %v318 = vrot.slane %v317, 2
        %v319 = vmax.f32 %v317, %v318
        %v320 = vrot.slane %v319, 1
        %v321 = vmax.f32 %v319, %v320
        %v322 = vsub.f32 %v303, %v321
        %v323 = vsub.f32 %v304, %v321
        %v324 = vmul.f32 %v322, 1.442695
        %v325 = vpow.pop %v324
        %v326 = vmul.f32 %v323, 1.442695
        %v327 = vpow.pop %v326
        %v328 = vsel %vm313, %v327, 0.0
        %v329 = vadd.f32 %v325, %v328
        %v330 = vrot.slane %v329, 4
        %v331 = vadd.f32 %v329, %v330
        %v332 = vrot.slane %v331, 2
        %v333 = vadd.f32 %v331, %v332
        %v334 = vrot.slane %v333, 1
        %v335 = vadd.f32 %v333, %v334
        %v336 = vrcp.pop %v335
        %v337 = vmul.f32 1.0, %v336
        %v338 = vlaneseq
        %v339 = vshrl.u32 %v338, 7
        %v340 = vadd.s32 %v339, 8
        %vm341 = vcmp.ge.f32.partialorder %v303, %v321
        %vm342 = vcmp.ge.f32.partialorder %v304, %v321
        %v343 = vsel %vm341, %v339, 10
        %v344 = vsel %vm342, %v340, 10
        %v345 = vsel %vm313, %v344, 2147483647
        %vm346 = vcmp.lt.s32.totalorder %v343, %v345
        %v347 = vsel %vm346, %v343, %v345
        %v348 = vrot.slane %v347, 4
        %vm349 = vcmp.lt.s32.totalorder %v347, %v348
        %v350 = vsel %vm349, %v347, %v348
        %v351 = vrot.slane %v350, 2
        %vm352 = vcmp.lt.s32.totalorder %v350, %v351
        %v353 = vsel %vm352, %v350, %v351
        %v354 = vrot.slane %v353, 1
        %vm355 = vcmp.lt.s32.totalorder %v353, %v354
        %v356 = vsel %vm355, %v353, %v354
        %vm357 = vcmp.eq.s32.totalorder %v356, %v305
        %v358 = vsel %vm357, 1, 0
        %v359 = vcvt.s32.f32 %v358
        %v360 = vsel %vm312, %v337, 0.0
        %v361 = vsel %vm312, %v359, 0.0
        %v362 = vld [vmem:[%s0] sm:$0xff]
        %v363 = vld [vmem:[%s0 + $0x8] sm:$0x7f]
        %v364 = vld [vmem:[%s1] sm:$0xff]
        %v365 = vld [vmem:[%s1 + $0x8] sm:$0x7f]
        %367 = vset.pattern.permute.xlu0 0
        %368 = vperm.xlu0 %367, %v362
        %v369 = vpop.permute.xlu0 %368
        %372 = vset.pattern.permute.xlu0 0
        %373 = vperm.xlu0 %372, %v363
        %v374 = vpop.permute.xlu0 %373
        %vm376 = vcmp.gt.f32.partialorder %v360, %v369
        %vm377 = vcmp.gt.f32.partialorder %v360, %v374
        %379 = vset.pattern.permute.xlu0 0
        %380 = vperm.xlu0 %379, %v364
        %v381 = vpop.permute.xlu0 %380
        %384 = vset.pattern.permute.xlu0 0
        %385 = vperm.xlu0 %384, %v365
        %v386 = vpop.permute.xlu0 %385
        %vm388 = vcmp.le.f32.partialorder %v360, %v381
        %vm389 = vcmp.le.f32.partialorder %v360, %v386
        %vm390 = vmand %vm376, %vm388
        %vm391 = vmand %vm377, %vm389
        %v392 = vsel %vm390, 1, 0
        %v393 = vsel %vm391, 1, 0
        %v394 = vcvt.s32.f32 %v392
        %v395 = vcvt.s32.f32 %v393
        %v396 = vld [vmem:[#allocation2] sm:$0xff]
        %v397 = vld [vmem:[#allocation2 + $0x8] sm:$0x7f]
        %v398 = vmul.f32 %v394, %v360
        %v399 = vmul.f32 %v395, %v360
        %v400 = vadd.f32 %v396, %v398
        %v401 = vadd.f32 %v397, %v399
        %402 = vst [vmem:[#allocation2] sm:$0xff] %v400
        %403 = vst [vmem:[#allocation2 + $0x8] sm:$0x7f] %v401
        %v404 = vld [vmem:[#allocation3] sm:$0xff]
        %v405 = vld [vmem:[#allocation3 + $0x8] sm:$0x7f]
        %v406 = vlaneseq
        %v407 = vshrl.u32 %v406, 7
        %v408 = vsub.s32 0, %v407
        %v409 = vrot.slane %v361, %v408
        %v410 = vmul.f32 %v394, %v409
        %v411 = vmul.f32 %v395, %v409
        %v412 = vadd.f32 %v404, %v410
        %v413 = vadd.f32 %v405, %v411
        %414 = vst [vmem:[#allocation3] sm:$0xff] %v412
        %415 = vst [vmem:[#allocation3 + $0x8] sm:$0x7f] %v413
        // Predicated region
        $region79: #{tpu_custom_call.1} parent=69 // pred_check
          %p416 = pneg %p295
        $region80: #{tpu_custom_call.1} parent=69 // pred_check_branch
          %418 = sbr.rel (%p416) target = $region82
        $region81: #{tpu_custom_call.1} parent=69 // pred_region
          %v419 = vld [vmem:[#allocation2] sm:$0xff]
          %v420 = vld [vmem:[#allocation2 + $0x8] sm:$0x7f]
          %421 = vadd.xlane.f32.xlu0 %v419
          %v422 = vpop.xlane.xlu0 %421
          %vm423 = vcmask 1046528
          %v424 = vsel %vm423, %v420, 0.0
          %425 = vadd.xlane.f32.xlu0 %v424
          %v426 = vpop.xlane.xlu0 %425
          %v427 = vld [vmem:[#allocation3] sm:$0xff]
          %v428 = vld [vmem:[#allocation3 + $0x8] sm:$0x7f]
          %429 = vadd.xlane.f32.xlu0 %v427
          %v430 = vpop.xlane.xlu0 %429
          %v431 = vsel %vm423, %v428, 0.0
          %432 = vadd.xlane.f32.xlu0 %v431
          %v433 = vpop.xlane.xlu0 %432
          %vm434 = vcmask 7168
          %v435 = vsel %vm434, %v422, %v430
          %v436 = vsel %vm434, %v426, %v433
          %vm437 = vcmask 15360
          %438 = vst.msk [vmem:[%s294] sm:$0xff] %vm437, %v435
          %vm439 = vcmask 14336
          %440 = vst.msk [vmem:[%s294 + $0x8] sm:$0x7f] %vm439, %v436
        $region82: #{tpu_custom_call.1} parent=69 // pred_fallthru
          _
        %p441 = scmp.lt.s32.totalorder %s19, 1
        %s442 = scalar_select %p441, %s19, 1
        %s443 = smul.addr %s442, 2
        %s444 = smul.addr %s443, 8
        %s445 = scalar_lea.vmem %s4, %s444
        // Predicated region
        $region83: #{tpu_custom_call.1} parent=69 // pred_check
          %p446 = pneg %p151
        $region84: #{tpu_custom_call.1} parent=69 // pred_check_branch
          %448 = sbr.rel (%p446) target = $region86
        $region85: #{tpu_custom_call.1} parent=69 // pred_region
          _
        $region86: #{tpu_custom_call.1} parent=69 // pred_fallthru
          _
      $region70: #{tpu_custom_call.1} parent=5 // pred_fallthru
        _
      %p449 = scmp.le.s32.totalorder 2, %s10
      // Predicated region
      $region87: #{tpu_custom_call.1} parent=5 // pred_check
        %p450 = pneg %p449
      $region88: #{tpu_custom_call.1} parent=5 // pred_check_branch
        %452 = sbr.rel (%p450) target = $region90
      $region89: #{tpu_custom_call.1} parent=5 // pred_region
        %s453 = ssub.s32 %s10, 2
        // Predicated region
        $region91: #{tpu_custom_call.1} parent=89 // pred_check
          %p454 = pneg %p157
        $region92: #{tpu_custom_call.1} parent=89 // pred_check_branch
          %456 = sbr.rel (%p454) target = $region94
        $region93: #{tpu_custom_call.1} parent=89 // pred_region
          %p457 = scmp.lt.s32.totalorder %s21, 1
          %s458 = scalar_select %p457, %s21, 1
          %s459 = smul.addr %s458, 2
          %s460 = smul.addr %s459, 8
          %s461 = scalar_lea.vmem %s4, %s460
        $region94: #{tpu_custom_call.1} parent=89 // pred_fallthru
          _
      $region90: #{tpu_custom_call.1} parent=5 // pred_fallthru
        _
    $region6: #{tpu_custom_call.1} parent=1 // loop_footer
      %s14 = sadd.s32 1, %s10
    $region7: #{tpu_custom_call.1} parent=1 // loop_footer_branch
      %9 = sbr.rel target = $region3
    $region8: #{tpu_custom_call.1} parent=1 // loop_exit
      _

</llo_original>
